<compile_context>
chip_gen: v5e
topology: v5e:2x2
jax: 0.10.0
libtpu: 0.0.40
codegen_flags: <defaults>
</compile_context>

<pallas_src>
import functools

import jax
import jax.numpy as jnp
from jax import lax
from jax.experimental import pallas as pl
from jax.experimental.pallas import tpu as pltpu


def _round_up(x, m):
    return ((x + m - 1) // m) * m


def _detect_vmem_limit():
    """Generation-aware scoped-VMEM limit: ~5/8 of physical, capped at 96 MiB."""
    cap = 128 * 1024 * 1024
    try:
        info = pltpu.get_tpu_info()
        cap = int(getattr(info, "vmem_capacity_bytes", cap)) or cap
    except Exception:
        pass  # fall back to the 128 MiB (v5e/v6e) assumption
    return int(max(32 * 1024 * 1024, min(cap * 5 // 8, 96 * 1024 * 1024)))


def _online_lse_update(sims, kd, n_kd, n_valid_last, m_ref, l_ref):
    """One flash-style online-logsumexp update for a [TB, TN] tile of cosine logits."""
    if n_valid_last is not None:
        # Only the last doc tile contains padded columns; kill them with -1e30 there.
        col = lax.broadcasted_iota(jnp.int32, (1, sims.shape[1]), 1)
        pad = jnp.logical_and(kd == n_kd - 1, col >= n_valid_last)
        sims = jnp.where(pad, -1e30, sims)
    m_prev = m_ref[...]
    m_new = jnp.maximum(m_prev, jnp.max(sims, axis=1, keepdims=True))
    l_ref[...] = (l_ref[...] * jnp.exp(m_prev - m_new)
                  + jnp.sum(jnp.exp(sims - m_new), axis=1, keepdims=True))
    m_ref[...] = m_new


def _lse_kernel(q_ref, dt_ref, out_ref, m_ref, l_ref, *, n_kd, n_valid_last):
    """Grid (i, kd): query tile resident over kd, docs streamed; H un-tiled."""
    kd = pl.program_id(1)

    @pl.when(kd == 0)
    def _init():
        m_ref[...] = jnp.full(m_ref.shape, -jnp.inf, jnp.float32)
        l_ref[...] = jnp.zeros(l_ref.shape, jnp.float32)

    # Raw cosine logits on the MXU: [TB, H] @ [H, TN] -> f32.  Norms already folded
    # into the operands in the wrapper; docs pre-transposed -> contraction (1, 0),
    # no in-kernel XLU transpose.
    sims = lax.dot_general(
        q_ref[...], dt_ref[...],
        dimension_numbers=(((1,), (0,)), ((), ())),
        preferred_element_type=jnp.float32,
    )
    _online_lse_update(sims, kd, n_kd, n_valid_last, m_ref, l_ref)

    @pl.when(kd == n_kd - 1)
    def _finalize():
        out_ref[...] = m_ref[...] + jnp.log(l_ref[...])


def _lse_kernel_ktiled(q_ref, dt_ref, out_ref, acc_ref, m_ref, l_ref, *,
                       n_kd, n_kh, n_valid_last):
    """Grid (i, kd, kh): hidden dim tiled with an f32 accumulator (kh innermost)."""
    kd = pl.program_id(1)
    kh = pl.program_id(2)

    @pl.when(jnp.logical_and(kd == 0, kh == 0))
    def _init():
        m_ref[...] = jnp.full(m_ref.shape, -jnp.inf, jnp.float32)
        l_ref[...] = jnp.zeros(l_ref.shape, jnp.float32)

    @pl.when(kh == 0)
    def _zero_acc():
        acc_ref[...] = jnp.zeros(acc_ref.shape, jnp.float32)

    acc_ref[...] += lax.dot_general(
        q_ref[...], dt_ref[...],
        dimension_numbers=(((1,), (0,)), ((), ())),
        preferred_element_type=jnp.float32,
    )

    @pl.when(kh == n_kh - 1)
    def _update():
        _online_lse_update(acc_ref[...], kd, n_kd, n_valid_last, m_ref, l_ref)

    @pl.when(jnp.logical_and(kh == n_kh - 1, kd == n_kd - 1))
    def _finalize():
        out_ref[...] = m_ref[...] + jnp.log(l_ref[...])


def entropy_loss_pallas(qemb, demb, *, block_b=512, block_n=1024, block_h=2048,
                        matmul_dtype=jnp.bfloat16, doc_buffer_count=2):
    """mean_i [ logsumexp_j cos(q_i, d_j) - cos(q_i, d_i) ]  (CrossEntropy, labels=arange)."""
    B, H = qemb.shape
    N, Hd = demb.shape
    assert Hd == H
    # labels = arange(B): row i's positive is demb[i]; torch CE would error otherwise.
    assert N >= B, "EntropyLoss requires at least as many docs as queries"

    in_dtype = jnp.dtype(qemb.dtype)
    # Force bf16 MXU operands when inputs are f32; never up-cast narrower inputs.
    compute_dtype = jnp.dtype(matmul_dtype) if in_dtype == jnp.dtype(jnp.float32) else in_dtype
    itemsize = compute_dtype.itemsize

    # ---- tile sizes ------------------------------------------------------------
    sublane = 8 * max(1, 4 // itemsize)            # 8 (f32), 16 (bf16), 32 (int8/fp8)
    TB = _round_up(min(block_b, _round_up(B, sublane)), sublane)
    Bp = _round_up(B, TB)
    TN = _round_up(min(block_n, _round_up(N, 128)), 128)
    Np = _round_up(N, TN)
    n_i, n_kd = Bp // TB, Np // TN

    if H <= block_h or H <= 128:
        TKH, Hp, n_kh = H, H, 1                    # hidden dim un-tiled (common case)
    else:
        TKH = _round_up(min(block_h, H), 128)
        Hp = _round_up(H, TKH)
        n_kh = Hp // TKH

    # ---- wrapper-side normalization / padding (single pass over q and d) --------
    q32 = qemb.astype(jnp.float32)
    d32 = demb.astype(jnp.float32)
    inv_q = lax.rsqrt(jnp.maximum(jnp.sum(q32 * q32, axis=1, keepdims=True), 1e-24))
    inv_d = lax.rsqrt(jnp.maximum(jnp.sum(d32 * d32, axis=1, keepdims=True), 1e-24))
    qn = q32 * inv_q                               # [B, H]  cosine-normalized, f32
    dn = d32 * inv_d                               # [N, H]

    # Positive-pair (diagonal) logits: tiny O(B*H) f32 reduction, kept outside the kernel.
    target = jnp.sum(qn * dn[:B], axis=1)          # [B]

    q_p = jnp.zeros((Bp, Hp), compute_dtype).at[:B, :H].set(qn.astype(compute_dtype))
    dt_p = jnp.zeros((Hp, Np), compute_dtype).at[:H, :N].set(dn.T.astype(compute_dtype))

    n_valid_last = None if Np == N else (N - (n_kd - 1) * TN)

    # Optional deeper doc-stream buffering (useful on v5e's slower HBM).
    dt_extra = {}
    if doc_buffer_count and doc_buffer_count != 2:
        dt_extra = dict(pipeline_mode=pl.Buffered(doc_buffer_count))

    # ---- grid / specs ------------------------------------------------------------
    if n_kh == 1:
        kernel = functools.partial(_lse_kernel, n_kd=n_kd, n_valid_last=n_valid_last)
        grid = (n_i, n_kd)
        in_specs = [
            pl.BlockSpec((TB, Hp), lambda i, kd: (i, 0)),              # q: resident over kd
            pl.BlockSpec((TKH, TN), lambda i, kd: (0, kd), **dt_extra),  # docs streamed
        ]
        out_spec = pl.BlockSpec((TB, 1), lambda i, kd: (i, 0))
        scratch = [pltpu.VMEM((TB, 1), jnp.float32),   # running max  m
                   pltpu.VMEM((TB, 1), jnp.float32)]   # running sum  l
        dims = ("parallel", "arbitrary")
        q_stream_bytes = Bp * Hp * itemsize
    else:
        kernel = functools.partial(_lse_kernel_ktiled, n_kd=n_kd, n_kh=n_kh,
                                   n_valid_last=n_valid_last)
        grid = (n_i, n_kd, n_kh)
        in_specs = [
            pl.BlockSpec((TB, TKH), lambda i, kd, kh: (i, kh)),
            pl.BlockSpec((TKH, TN), lambda i, kd, kh: (kh, kd), **dt_extra),
        ]
        out_spec = pl.BlockSpec((TB, 1), lambda i, kd, kh: (i, 0))
        scratch = [pltpu.VMEM((TB, TN), jnp.float32),  # f32 matmul accumulator
                   pltpu.VMEM((TB, 1), jnp.float32),
                   pltpu.VMEM((TB, 1), jnp.float32)]
        dims = ("parallel", "arbitrary", "arbitrary")
        q_stream_bytes = n_kd * Bp * Hp * itemsize     # q re-streamed per doc tile

    per_row = pl.pallas_call(
        kernel,
        out_shape=jax.ShapeDtypeStruct((Bp, 1), jnp.float32),
        grid_spec=pltpu.PrefetchScalarGridSpec(
            num_scalar_prefetch=0,
            grid=grid,
            in_specs=in_specs,
            out_specs=out_spec,
            scratch_shapes=scratch),
        compiler_params=pltpu.CompilerParams(
            dimension_semantics=dims,
            vmem_limit_bytes=_detect_vmem_limit()),
        cost_estimate=pl.CostEstimate(
            flops=2 * Bp * Np * Hp,
            transcendentals=Bp * Np,
            bytes_accessed=q_stream_bytes + n_i * Np * Hp * itemsize + Bp * 4),
    )(q_p, dt_p)

    # per-row loss_i = logsumexp_j(s_ij) - s_ii ; mean over the real B rows only.
    return jnp.sum(per_row[:B, 0] - target) / B


def reference_loss(qemb, demb):
    qn = qemb / jnp.maximum(jnp.linalg.norm(qemb, axis=1, keepdims=True), 1e-12)
    dn = demb / jnp.maximum(jnp.linalg.norm(demb, axis=1, keepdims=True), 1e-12)
    sims = qn @ dn.T
    logp = jax.nn.log_softmax(sims, axis=1)
    return -jnp.mean(logp[jnp.arange(sims.shape[0]), jnp.arange(sims.shape[0])])


def fake_sentence_encoder(features, w_proj):
    # glue: stand-in for self.model(sentence_feature)['sentence_embedding']
    pooled = jnp.mean(features, axis=1)            # [B, F]
    return pooled @ w_proj                         # [B, H]


if __name__ == "__main__":
    key = jax.random.PRNGKey(0)
    B, SEQ, FEAT, HID = 8, 8, 16, 32
    k1, k2, k3, k4 = jax.random.split(key, 4)

    # sentence_features: [query_batch, doc_batch_1, doc_batch_2]
    sentence_features = [
        jax.random.normal(k1, (B, SEQ, FEAT), dtype=jnp.float32),
        jax.random.normal(k2, (B, SEQ, FEAT), dtype=jnp.float32),
        jax.random.normal(k3, (B, SEQ, FEAT), dtype=jnp.float32),
    ]
    w_proj = jax.random.normal(k4, (FEAT, HID), dtype=jnp.float32) * 0.1

    reps = [fake_sentence_encoder(f, w_proj) for f in sentence_features]
    qemb = reps[0]                                 # [B, H]
    demb = jnp.concatenate(reps[1:], axis=0)       # [2B, H]
    ref = reference_loss(qemb, demb)

    # 1) default: bf16 MXU operands, f32 accumulation / softmax math.
    #    (loose tolerance: bf16 operands vs f32 reference, per review note)
    loss = jax.jit(entropy_loss_pallas)(qemb, demb)
    jax.block_until_ready(loss)
    assert jnp.allclose(loss, ref, atol=2e-2, rtol=2e-2), (loss, ref)

    # 2) f32 MXU operands via the matmul_dtype knob.
    loss32 = jax.jit(functools.partial(entropy_loss_pallas,
                                       matmul_dtype=jnp.float32))(qemb, demb)
    jax.block_until_ready(loss32)
    assert jnp.allclose(loss32, ref, atol=2e-2, rtol=2e-2), (loss32, ref)

    # 3) exercise the hidden-dim (K) tiled path: H=256 split into 128-wide chunks.
    HID2 = 256
    k5, _ = jax.random.split(k4)
    w2 = jax.random.normal(k5, (FEAT, HID2), dtype=jnp.float32) * 0.1
    reps2 = [fake_sentence_encoder(f, w2) for f in sentence_features]
    q2, d2 = reps2[0], jnp.concatenate(reps2[1:], axis=0)
    ref2 = reference_loss(q2, d2)
    loss2 = jax.jit(functools.partial(entropy_loss_pallas, block_h=128))(q2, d2)
    jax.block_until_ready(loss2)
    assert jnp.allclose(loss2, ref2, atol=2e-2, rtol=2e-2), (loss2, ref2)

    print("KERNEL_OK")
</pallas_src>

<mosaic_0001>
module attributes {stable_mosaic.version = 11 : i64} {
  func.func @_lse_kernel(%arg0: i32, %arg1: i32, %arg2: memref<16x32xbf16, #tpu.memory_space<vmem>>, %arg3: memref<32x128xbf16, #tpu.memory_space<vmem>>, %arg4: memref<16x1xf32, #tpu.memory_space<vmem>>, %arg5: memref<16x1xf32, #tpu.memory_space<vmem>>, %arg6: memref<16x1xf32, #tpu.memory_space<vmem>>) attributes {dimension_semantics = [#tpu.dimension_semantics<parallel>, #tpu.dimension_semantics<arbitrary>], iteration_bounds = array<i64: 1, 1>, scalar_prefetch = 0 : i64, scratch_operands = 2 : i64, tpu.core_type = #tpu.core_type<tc>, window_params = [{transform_indices = @transform_0, window_bounds = array<i64: 16, 32>}, {transform_indices = @transform_1, window_bounds = array<i64: 32, 128>}, {transform_indices = @transform_2, window_bounds = array<i64: 16, 1>}]} {
    %c0_i32 = arith.constant 0 : i32
    %0 = arith.cmpi eq, %arg1, %c0_i32 : i32
    %1 = arith.extui %0 : i1 to i32
    %c0_i32_0 = arith.constant 0 : i32
    %2 = arith.cmpi ne, %1, %c0_i32_0 : i32
    scf.if %2 {
      %cst_18 = arith.constant 0xFF800000 : f32
      %35 = vector.broadcast %cst_18 : f32 to vector<16x1xf32>
      %c0_19 = arith.constant 0 : index
      %c0_20 = arith.constant 0 : index
      %36 = vector.load %arg5[%c0_19, %c0_20] : memref<16x1xf32, #tpu.memory_space<vmem>>, vector<16x1xf32>
      tpu.vector_store %arg5[%c0_19, %c0_20], %35 {strides = array<i32>} : memref<16x1xf32, #tpu.memory_space<vmem>>, vector<16x1xf32>,
      %cst_21 = arith.constant 0.000000e+00 : f32
      %37 = vector.broadcast %cst_21 : f32 to vector<16x1xf32>
      %c0_22 = arith.constant 0 : index
      %c0_23 = arith.constant 0 : index
      %38 = vector.load %arg6[%c0_22, %c0_23] : memref<16x1xf32, #tpu.memory_space<vmem>>, vector<16x1xf32>
      tpu.vector_store %arg6[%c0_22, %c0_23], %37 {strides = array<i32>} : memref<16x1xf32, #tpu.memory_space<vmem>>, vector<16x1xf32>,
    } else {
    }
    %c0 = arith.constant 0 : index
    %c0_1 = arith.constant 0 : index
    %3 = vector.load %arg2[%c0, %c0_1] : memref<16x32xbf16, #tpu.memory_space<vmem>>, vector<16x32xbf16>
    %c0_2 = arith.constant 0 : index
    %c0_3 = arith.constant 0 : index
    %4 = vector.load %arg3[%c0_2, %c0_3] : memref<32x128xbf16, #tpu.memory_space<vmem>>, vector<32x128xbf16>
    %cst = arith.constant dense<0.000000e+00> : vector<16x128xf32>
    %5 = tpu.matmul %3, %4, %cst {dimension_numbers = #tpu.dot_dimension_numbers<[1], [0], [0], [1], [0, 0, 1, 1], [], []>} : vector<16x32xbf16>, vector<32x128xbf16>, vector<16x128xf32> -> vector<16x128xf32>
    %6 = tpu.iota {dimensions = array<i32: 1>} : vector<1x128xi32>
    %c0_i32_4 = arith.constant 0 : i32
    %7 = arith.cmpi eq, %arg1, %c0_i32_4 : i32
    %c16_i32 = arith.constant 16 : i32
    %8 = vector.broadcast %c16_i32 : i32 to vector<1x128xi32>
    %9 = arith.cmpi sge, %6, %8 : vector<1x128xi32>
    %10 = vector.broadcast %7 : i1 to vector<1x128xi1>
    %11 = arith.andi %10, %9 : vector<1x128xi1>
    %cst_5 = arith.constant -1.000000e+30 : f32
    %12 = vector.shape_cast %11 : vector<1x128xi1> to vector<1x128xi1>
    %13 = vector.broadcast %12 : vector<1x128xi1> to vector<16x128xi1>
    %14 = vector.broadcast %cst_5 : f32 to vector<16x128xf32>
    %15 = arith.select %13, %14, %5 : vector<16x128xi1>, vector<16x128xf32>
    %c0_6 = arith.constant 0 : index
    %c0_7 = arith.constant 0 : index
    %16 = vector.load %arg5[%c0_6, %c0_7] : memref<16x1xf32, #tpu.memory_space<vmem>>, vector<16x1xf32>
    %cst_8 = arith.constant dense<0xFF800000> : vector<16xf32>
    %17 = vector.multi_reduction <maximumf>, %15, %cst_8 [1] : vector<16x128xf32> to vector<16xf32>
    %18 = vector.shape_cast %17 : vector<16xf32> to vector<16x1xf32>
    %19 = arith.maximumf %16, %18 : vector<16x1xf32>
    %c0_9 = arith.constant 0 : index
    %c0_10 = arith.constant 0 : index
    %20 = vector.load %arg6[%c0_9, %c0_10] : memref<16x1xf32, #tpu.memory_space<vmem>>, vector<16x1xf32>
    %21 = arith.subf %16, %19 : vector<16x1xf32>
    %22 = math.exp %21 : vector<16x1xf32>
    %23 = arith.mulf %20, %22 : vector<16x1xf32>
    %24 = vector.broadcast %19 : vector<16x1xf32> to vector<16x128xf32>
    %25 = arith.subf %15, %24 : vector<16x128xf32>
    %26 = math.exp %25 : vector<16x128xf32>
    %cst_11 = arith.constant dense<0.000000e+00> : vector<16xf32>
    %27 = vector.multi_reduction <add>, %26, %cst_11 [1] : vector<16x128xf32> to vector<16xf32>
    %28 = vector.shape_cast %27 : vector<16xf32> to vector<16x1xf32>
    %29 = arith.addf %23, %28 : vector<16x1xf32>
    %c0_12 = arith.constant 0 : index
    %c0_13 = arith.constant 0 : index
    %30 = vector.load %arg6[%c0_12, %c0_13] : memref<16x1xf32, #tpu.memory_space<vmem>>, vector<16x1xf32>
    tpu.vector_store %arg6[%c0_12, %c0_13], %29 {strides = array<i32>} : memref<16x1xf32, #tpu.memory_space<vmem>>, vector<16x1xf32>,
    %c0_14 = arith.constant 0 : index
    %c0_15 = arith.constant 0 : index
    %31 = vector.load %arg5[%c0_14, %c0_15] : memref<16x1xf32, #tpu.memory_space<vmem>>, vector<16x1xf32>
    tpu.vector_store %arg5[%c0_14, %c0_15], %19 {strides = array<i32>} : memref<16x1xf32, #tpu.memory_space<vmem>>, vector<16x1xf32>,
    %c0_i32_16 = arith.constant 0 : i32
    %32 = arith.cmpi eq, %arg1, %c0_i32_16 : i32
    %33 = arith.extui %32 : i1 to i32
    %c0_i32_17 = arith.constant 0 : i32
    %34 = arith.cmpi ne, %33, %c0_i32_17 : i32
    scf.if %34 {
      %c0_18 = arith.constant 0 : index
      %c0_19 = arith.constant 0 : index
      %35 = vector.load %arg5[%c0_18, %c0_19] : memref<16x1xf32, #tpu.memory_space<vmem>>, vector<16x1xf32>
      %c0_20 = arith.constant 0 : index
      %c0_21 = arith.constant 0 : index
      %36 = vector.load %arg6[%c0_20, %c0_21] : memref<16x1xf32, #tpu.memory_space<vmem>>, vector<16x1xf32>
      %37 = math.log %36 : vector<16x1xf32>
      %38 = arith.addf %35, %37 : vector<16x1xf32>
      %c0_22 = arith.constant 0 : index
      %c0_23 = arith.constant 0 : index
      %39 = vector.load %arg4[%c0_22, %c0_23] : memref<16x1xf32, #tpu.memory_space<vmem>>, vector<16x1xf32>
      tpu.vector_store %arg4[%c0_22, %c0_23], %38 {strides = array<i32>} : memref<16x1xf32, #tpu.memory_space<vmem>>, vector<16x1xf32>,
    } else {
    }
    return
  }
  func.func @transform_0(%arg0: i32, %arg1: i32) -> (i32, i32) {
    %c0_i32 = arith.constant 0 : i32
    %c0_i32_0 = arith.constant 0 : i32
    return %arg0, %c0_i32 : i32, i32
  }
  func.func @transform_1(%arg0: i32, %arg1: i32) -> (i32, i32) {
    %c0_i32 = arith.constant 0 : i32
    %c0_i32_0 = arith.constant 0 : i32
    return %c0_i32, %arg1 : i32, i32
  }
  func.func @transform_2(%arg0: i32, %arg1: i32) -> (i32, i32) {
    %c0_i32 = arith.constant 0 : i32
    %c0_i32_0 = arith.constant 0 : i32
    return %arg0, %c0_i32 : i32, i32
  }
}

</mosaic_0001>

<llo_original>
// kernel: entropy_loss_pallas.1
$region0: #{entropy_loss_pallas.1}
  #allocation0 [shape = 'u32[]', space=smem, size = 0x4, offset = 0x4, fixed_abs, tag = 'smem constant byte address 0x4 - core index']
  #allocation1 [shape = 'u32[72,128]{1,0:T(1,128)}', space=vmem, size = 0x9000, scoped, tag = 'internal scratch']
  #allocation2 [shape = 'f32[16,1]{1,0:T(8,128)}', space=vmem, size = 0x2000, scoped, tag = 'scratch operand']
  #allocation3 [shape = 'f32[16,1]{1,0:T(8,128)}', space=vmem, size = 0x2000, scoped, tag = 'scratch operand']
  %s0 = inlined_call_operand.vmem [shape: bf16[16,32], index: 0, kind: input, shape index: {}]
  %s1 = inlined_call_operand.vmem [shape: bf16[32,128], index: 1, kind: input, shape index: {}]
  %s2 = inlined_call_operand.vmem [shape: f32[16,1], index: 2, kind: output, shape index: {}]
  %s3 = sld [smem:[#allocation0]]
  $region26: #{entropy_loss_pallas.1} parent=0
    _
  %s5 = ssub.s32 1, %s3
  %s6 = scalar_select 0, %s5, %s3
  // Predicated region
  $region2: #{entropy_loss_pallas.1} parent=0 // pred_check
    _
  $region3: #{entropy_loss_pallas.1} parent=0 // pred_check_branch
    %8 = sbr.rel (0) target = $region5
  $region4: #{entropy_loss_pallas.1} parent=0 // pred_region
    _
  $region5: #{entropy_loss_pallas.1} parent=0 // pred_fallthru
    _
  // Predicated region
  $region6: #{entropy_loss_pallas.1} parent=0 // pred_check
    _
  $region7: #{entropy_loss_pallas.1} parent=0 // pred_check_branch
    %10 = sbr.rel (0) target = $region9
  $region8: #{entropy_loss_pallas.1} parent=0 // pred_region
    _
  $region9: #{entropy_loss_pallas.1} parent=0 // pred_fallthru
    _
  %p12 = scmp.eq.s32.totalorder 0, 0
  // Predicated region
  $region10: #{entropy_loss_pallas.1} parent=0 // pred_check
    %p13 = pneg %p12
  $region11: #{entropy_loss_pallas.1} parent=0 // pred_check_branch
    %15 = sbr.rel (%p13) target = $region13
  $region12: #{entropy_loss_pallas.1} parent=0 // pred_region
    %vm16 = vcmask 7168
    %17 = vst.msk [vmem:[#allocation2] sm:$0xff] %vm16, -inf
    %18 = vst.msk [vmem:[#allocation2 + $0x8] sm:$0xff] %vm16, -inf
    %19 = vst.msk [vmem:[#allocation3] sm:$0xff] %vm16, 0.0
    %20 = vst.msk [vmem:[#allocation3 + $0x8] sm:$0xff] %vm16, 0.0
  $region13: #{entropy_loss_pallas.1} parent=0 // pred_fallthru
    _
  %v21 = vld [vmem:[%s0] sm:$0xf]
  %v22 = vld [vmem:[%s0 + $0x4] sm:$0xf]
  %v23 = vld [vmem:[%s1] sm:$0xf]
  %v24 = vld [vmem:[%s1 + $0x4] sm:$0xf]
  %v25 = vld [vmem:[%s1 + $0x8] sm:$0xf]
  %v26 = vld [vmem:[%s1 + $0xc] sm:$0xf]
  %v29 = vunpack.c.l.b16 %v21
  %v30 = vunpack.c.l.b16 %v22
  %v31 = vpack.c.b16 %v30, %v29
  %v36 = vunpack.c.l.b16 %v23
  %v37 = vunpack.c.l.b16 %v24
  %v38 = vunpack.c.l.b16 %v25
  %v39 = vunpack.c.l.b16 %v26
  %v40 = vpack.c.b16 %v37, %v36
  %v41 = vpack.c.b16 %v39, %v38
  %vm44 = vcmask 261120
  %v46 = vsel %vm44, %v31, 0
  %48 = vmatpush.bf16.msra.mxu0 0
  %49 = vmatpush.bf16.msra.mxu0 0
  %50 = vmatpush.bf16.msra.mxu0 0
  %51 = vmatpush.bf16.msra.mxu0 0
  %52 = vmatpush.bf16.msra.mxu0 0
  %53 = vmatpush.bf16.msra.mxu0 0
  %54 = vmatpush.bf16.msra.mxu0 %v41
  %55 = vmatpush.bf16.msra.mxu0 %v40
  %56 = vmatmul.bf16.gmra.mxu0 %v46
  %v57 = vpop.f32.mrf.mxu0
  %v58 = vadd.f32 0.0, %v57
  %v59 = vpop.f32.mrf.mxu0
  %v60 = vadd.f32 0.0, %v59
  %61 = vdwg.mxu0
  %v62 = vlaneseq
  %v63 = vand.u32 %v62, 127
  %vm64 = vcmp.ge.s32.totalorder %v63, 16
  %s65 = scalar_select %p12, 1, 0
  %v66 = vstv %s65
  %vm67 = vcmp.eq.s32.totalorder %v66, 1
  %vm68 = vmand %vm67, %vm64
  %v69 = vsel %vm68, 1, 0
  %vm70 = vcmp.eq.s32.totalorder %v69, 1
  %v71 = vsel %vm70, -1e+30, %v58
  %v72 = vsel %vm70, -1e+30, %v60
  %v73 = vld [vmem:[#allocation2] sm:$0xff]
  %v74 = vld [vmem:[#allocation2 + $0x8] sm:$0xff]
  %75 = vmax.xlane.f32.xlu0 %v71
  %v76 = vpop.xlane.xlu0 %75
  %77 = vmax.xlane.f32.xlu0 %v72
  %v78 = vpop.xlane.xlu0 %77
  %v79 = vmax.f32 %v73, %v76
  %v80 = vmax.f32 %v74, %v78
  %v81 = vld [vmem:[#allocation3] sm:$0xff]
  %v82 = vld [vmem:[#allocation3 + $0x8] sm:$0xff]
  %v83 = vsub.f32 %v73, %v79
  %v84 = vsub.f32 %v74, %v80
  %v85 = vmul.f32 %v83, 1.442695
  %v86 = vpow.pop %v85
  %v87 = vmul.f32 %v84, 1.442695
  %v88 = vpow.pop %v87
  %v89 = vmul.f32 %v81, %v86
  %v90 = vmul.f32 %v82, %v88
  %92 = vset.pattern.permute.xlu0 0
  %93 = vperm.xlu0 %92, %v79
  %v94 = vpop.permute.xlu0 %93
  %97 = vset.pattern.permute.xlu0 0
  %98 = vperm.xlu0 %97, %v80
  %v99 = vpop.permute.xlu0 %98
  %v101 = vsub.f32 %v71, %v94
  %v102 = vsub.f32 %v72, %v99
  %v103 = vmul.f32 %v101, 1.442695
  %v104 = vpow.pop %v103
  %v105 = vmul.f32 %v102, 1.442695
  %v106 = vpow.pop %v105
  %107 = vadd.xlane.f32.xlu0 %v104
  %v108 = vpop.xlane.xlu0 %107
  %109 = vadd.xlane.f32.xlu0 %v106
  %v110 = vpop.xlane.xlu0 %109
  %v111 = vadd.f32 %v89, %v108
  %v112 = vadd.f32 %v90, %v110
  %vm113 = vcmask 7168
  %114 = vst.msk [vmem:[#allocation3] sm:$0xff] %vm113, %v111
  %115 = vst.msk [vmem:[#allocation3 + $0x8] sm:$0xff] %vm113, %v112
  %116 = vst.msk [vmem:[#allocation2] sm:$0xff] %vm113, %v79
  %117 = vst.msk [vmem:[#allocation2 + $0x8] sm:$0xff] %vm113, %v80
  // Predicated region
  $region14: #{entropy_loss_pallas.1} parent=0 // pred_check
    %p118 = pneg %p12
  $region15: #{entropy_loss_pallas.1} parent=0 // pred_check_branch
    %120 = sbr.rel (%p118) target = $region17
  $region16: #{entropy_loss_pallas.1} parent=0 // pred_region
    %v121 = vld [vmem:[#allocation2] sm:$0xff]
    %v122 = vld [vmem:[#allocation2 + $0x8] sm:$0xff]
    %v123 = vld [vmem:[#allocation3] sm:$0xff]
    %v124 = vld [vmem:[#allocation3 + $0x8] sm:$0xff]
    %v125 = vlog2.pop %v123
    %v126 = vmul.f32 %v125, 0.6931472
    %v127 = vlog2.pop %v124
    %v128 = vmul.f32 %v127, 0.6931472
    %v129 = vadd.f32 %v121, %v126
    %v130 = vadd.f32 %v122, %v128
    %131 = vst.msk [vmem:[%s2] sm:$0xff] %vm113, %v129
    %132 = vst.msk [vmem:[%s2 + $0x8] sm:$0xff] %vm113, %v130
  $region17: #{entropy_loss_pallas.1} parent=0 // pred_fallthru
    _
  // Predicated region
  $region18: #{entropy_loss_pallas.1} parent=0 // pred_check
    _
  $region19: #{entropy_loss_pallas.1} parent=0 // pred_check_branch
    %134 = sbr.rel (0) target = $region21
  $region20: #{entropy_loss_pallas.1} parent=0 // pred_region
    _
  $region21: #{entropy_loss_pallas.1} parent=0 // pred_fallthru
    _
  // Predicated region
  $region22: #{entropy_loss_pallas.1} parent=0 // pred_check
    _
  $region23: #{entropy_loss_pallas.1} parent=0 // pred_check_branch
    %136 = sbr.rel (0) target = $region25
  $region24: #{entropy_loss_pallas.1} parent=0 // pred_region
    _
  $region25: #{entropy_loss_pallas.1} parent=0 // pred_fallthru
    _

</llo_original>
